<compile_context>
chip_gen: v7x
topology: tpu7x:2x2x1
jax: 0.10.0
libtpu: 0.0.40
codegen_flags: <defaults>
</compile_context>

<pallas_src>
import functools
import math

import jax
import jax.numpy as jnp
import numpy as np
from jax.experimental import pallas as pl
from jax.experimental.pallas import tpu as pltpu


# ----------------------------- Pallas kernel --------------------------------

def _unet_down_kernel(cols_ref, w_ref, o_ref, *, eps, negative_slope):
    """Fused conv(matmul) + InstanceNorm2d + LeakyReLU for one batch element.

    cols_ref: (1, K, S)      im2col patches, K = C_in*KH*KW, S = Ho*Wo
    w_ref:    (C_out, K)     conv weight (resident across the whole grid)
    o_ref:    (1, C_out, S)  lane-dense, NCHW-native output block
    """
    cols = cols_ref[0]                                   # (K, S)
    w = w_ref[...]                                       # (C_out, K)

    # Convolution as a single MXU matmul (default precision, f32 accumulation).
    y = jnp.dot(w, cols, preferred_element_type=jnp.float32)   # (C_out, S)

    # InstanceNorm2d: biased per-channel stats over the spatial (lane) axis,
    # one-pass variance E[y^2] - mean^2.
    inv_s = 1.0 / y.shape[1]
    mean = jnp.sum(y, axis=1, keepdims=True) * inv_s            # (C_out, 1)
    mean_sq = jnp.sum(y * y, axis=1, keepdims=True) * inv_s
    var = mean_sq - mean * mean
    yn = (y - mean) * jax.lax.rsqrt(var + eps)

    # LeakyReLU(0.2)
    o_ref[0] = jnp.where(yn >= 0, yn, negative_slope * yn)


# ----------------------------- Module wrapper --------------------------------

def unet_down_forward(x, weight, *, eps=1e-5, negative_slope=0.2):
    """x: (B, C_in, H, W) f32 NCHW; weight: (C_out, C_in, 4, 4) f32 (PyTorch OIHW).

    Returns (B, C_out, H//2, W//2) f32, matching UNetDown.forward (Instance path).
    """
    B, C_in, H, W = x.shape
    C_out, _, KH, KW = weight.shape
    assert H % 2 == 0 and W % 2 == 0
    Ho = (H + 2 - KH) // 2 + 1
    Wo = (W + 2 - KW) // 2 + 1
    S = Ho * Wo
    K = C_in * KH * KW

    # Zero-pad spatial dims by 1 (conv padding=1), stay in NCHW.
    xp = jnp.pad(x, ((0, 0), (0, 0), (1, 1), (1, 1)))

    # im2col in (B, K, S) layout with K ordered (c_in, kh, kw) so the weight needs
    # only a free reshape (no transpose).  The producer below is allowed to fuse
    # into the pallas input (allow_input_fusion), avoiding a separate HBM pass for
    # the 4x-inflated patch array.
    patches = jnp.stack(
        [xp[:, :, kh:kh + 2 * Ho:2, kw:kw + 2 * Wo:2]
         for kh in range(KH) for kw in range(KW)],
        axis=2)                                         # (B, C_in, KH*KW, Ho, Wo)
    cols = patches.reshape(B, K, S)                     # (B, K, S)

    # weight (C_out, C_in, kh, kw) -> (C_out, K); pure reshape, done once.
    w_mat = weight.reshape(C_out, K)

    kern = functools.partial(_unet_down_kernel, eps=eps,
                             negative_slope=negative_slope)
    y = pl.pallas_call(
        kern,
        out_shape=jax.ShapeDtypeStruct((B, C_out, S), jnp.float32),
        grid=(B,),
        in_specs=[
            pl.BlockSpec((1, K, S), lambda b: (b, 0, 0)),       # per-batch patches
            pl.BlockSpec((C_out, K), lambda b: (0, 0)),         # weight, resident
        ],
        out_specs=pl.BlockSpec((1, C_out, S), lambda b: (b, 0, 0)),
        compiler_params=pltpu.CompilerParams(
            dimension_semantics=("parallel",),          # megacore-shard batch (v7x)
            allow_input_fusion=[True, False],           # fuse im2col producer into input 0
            vmem_limit_bytes=48 * 1024 * 1024,          # headroom, < v7x 64 MiB physical
        ),
    )(cols, w_mat)

    # Output is already NCHW-ordered: (B, C_out, Ho*Wo) -> (B, C_out, Ho, Wo) is free.
    return y.reshape(B, C_out, Ho, Wo)


# ----------------------------- Pure-JAX reference ----------------------------

def reference_forward(x, weight, *, eps=1e-5, negative_slope=0.2):
    y = jax.lax.conv_general_dilated(
        x, weight, window_strides=(2, 2), padding=((1, 1), (1, 1)),
        dimension_numbers=("NCHW", "OIHW", "NCHW"),
        precision=jax.lax.Precision.HIGHEST)
    mean = jnp.mean(y, axis=(2, 3), keepdims=True)
    var = jnp.mean(jnp.square(y - mean), axis=(2, 3), keepdims=True)
    yn = (y - mean) * jax.lax.rsqrt(var + eps)
    return jnp.where(yn >= 0, yn, negative_slope * yn)


# ----------------------------- Main -------------------------------------------

if __name__ == "__main__":
    batch, in_size, out_size, H, W = 2, 4, 8, 16, 16

    key = jax.random.PRNGKey(0)
    kx, kw = jax.random.split(key)
    x = jax.random.normal(kx, (batch, in_size, H, W), dtype=jnp.float32)
    bound = 1.0 / math.sqrt(in_size * 4 * 4)   # PyTorch Conv2d default init range
    weight = jax.random.uniform(kw, (out_size, in_size, 4, 4), jnp.float32,
                                -bound, bound)

    fwd = jax.jit(unet_down_forward)           # jit so the im2col producer can fuse
    out = jax.block_until_ready(fwd(x, weight))
    ref = jax.block_until_ready(reference_forward(x, weight))

    # Kernel matmul uses default (single-pass MXU) precision vs. the HIGHEST-precision
    # reference, so the tolerance is loosened (InstanceNorm hides most, not all, of it).
    np.testing.assert_allclose(np.asarray(out), np.asarray(ref),
                               rtol=2e-2, atol=2e-2)

    print("KERNEL_OK")
</pallas_src>

<mosaic_0001>
module attributes {stable_mosaic.version = 11 : i64} {
  func.func @_unet_down_kernel(%arg0: i32, %arg1: memref<1x64x64xf32, #tpu.memory_space<vmem>>, %arg2: memref<8x64xf32, #tpu.memory_space<vmem>>, %arg3: memref<1x8x64xf32, #tpu.memory_space<vmem>>) attributes {dimension_semantics = [#tpu.dimension_semantics<parallel>], iteration_bounds = array<i64: 2>, scalar_prefetch = 0 : i64, scratch_operands = 0 : i64, tpu.core_type = #tpu.core_type<tc>, window_params = [{transform_indices = @transform_0, window_bounds = array<i64: 1, 64, 64>}, {pipeline_mode = #tpu.pipeline_mode<synchronous>, transform_indices = @transform_1, window_bounds = array<i64: 8, 64>}, {transform_indices = @transform_2, window_bounds = array<i64: 1, 8, 64>}]} {
    %c0 = arith.constant 0 : index
    %c0_0 = arith.constant 0 : index
    %c0_1 = arith.constant 0 : index
    %0 = vector.load %arg1[%c0, %c0_0, %c0_1] : memref<1x64x64xf32, #tpu.memory_space<vmem>>, vector<1x64x64xf32>
    %1 = vector.shape_cast %0 : vector<1x64x64xf32> to vector<64x64xf32>
    %c0_2 = arith.constant 0 : index
    %c0_3 = arith.constant 0 : index
    %2 = vector.load %arg2[%c0_2, %c0_3] : memref<8x64xf32, #tpu.memory_space<vmem>>, vector<8x64xf32>
    %cst = arith.constant dense<0.000000e+00> : vector<8x64xf32>
    %3 = tpu.matmul %2, %1, %cst {dimension_numbers = #tpu.dot_dimension_numbers<[1], [0], [0], [1], [0, 0, 1, 1], [], []>} : vector<8x64xf32>, vector<64x64xf32>, vector<8x64xf32> -> vector<8x64xf32>
    %cst_4 = arith.constant dense<0.000000e+00> : vector<8xf32>
    %4 = vector.multi_reduction <add>, %3, %cst_4 [1] : vector<8x64xf32> to vector<8xf32>
    %5 = vector.shape_cast %4 : vector<8xf32> to vector<8x1xf32>
    %cst_5 = arith.constant 1.562500e-02 : f32
    %6 = vector.broadcast %cst_5 : f32 to vector<8x1xf32>
    %7 = arith.mulf %5, %6 : vector<8x1xf32>
    %8 = arith.mulf %3, %3 : vector<8x64xf32>
    %cst_6 = arith.constant dense<0.000000e+00> : vector<8xf32>
    %9 = vector.multi_reduction <add>, %8, %cst_6 [1] : vector<8x64xf32> to vector<8xf32>
    %10 = vector.shape_cast %9 : vector<8xf32> to vector<8x1xf32>
    %cst_7 = arith.constant 1.562500e-02 : f32
    %11 = vector.broadcast %cst_7 : f32 to vector<8x1xf32>
    %12 = arith.mulf %10, %11 : vector<8x1xf32>
    %13 = arith.mulf %7, %7 : vector<8x1xf32>
    %14 = arith.subf %12, %13 : vector<8x1xf32>
    %15 = vector.broadcast %7 : vector<8x1xf32> to vector<8x64xf32>
    %16 = arith.subf %3, %15 : vector<8x64xf32>
    %cst_8 = arith.constant 9.99999974E-6 : f32
    %17 = vector.broadcast %cst_8 : f32 to vector<8x1xf32>
    %18 = arith.addf %14, %17 : vector<8x1xf32>
    %19 = math.rsqrt %18 : vector<8x1xf32>
    %20 = vector.broadcast %19 : vector<8x1xf32> to vector<8x64xf32>
    %21 = arith.mulf %16, %20 : vector<8x64xf32>
    %cst_9 = arith.constant 0.000000e+00 : f32
    %22 = vector.broadcast %cst_9 : f32 to vector<8x64xf32>
    %23 = arith.cmpf oge, %21, %22 : vector<8x64xf32>
    %cst_10 = arith.constant 2.000000e-01 : f32
    %24 = vector.broadcast %cst_10 : f32 to vector<8x64xf32>
    %25 = arith.mulf %24, %21 : vector<8x64xf32>
    %26 = arith.select %23, %21, %25 : vector<8x64xi1>, vector<8x64xf32>
    %c0_11 = arith.constant 0 : index
    %c0_12 = arith.constant 0 : index
    %c0_13 = arith.constant 0 : index
    %27 = vector.load %arg3[%c0_11, %c0_12, %c0_13] : memref<1x8x64xf32, #tpu.memory_space<vmem>>, vector<1x8x64xf32>
    %28 = vector.shape_cast %27 : vector<1x8x64xf32> to vector<8x64xf32>
    %29 = vector.shape_cast %26 : vector<8x64xf32> to vector<1x8x64xf32>
    tpu.vector_store %arg3[%c0_11, %c0_12, %c0_13], %29 {strides = array<i32>} : memref<1x8x64xf32, #tpu.memory_space<vmem>>, vector<1x8x64xf32>,
    return
  }
  func.func @transform_0(%arg0: i32) -> (i32, i32, i32) {
    %c0_i32 = arith.constant 0 : i32
    %c0_i32_0 = arith.constant 0 : i32
    %c0_i32_1 = arith.constant 0 : i32
    return %arg0, %c0_i32, %c0_i32_0 : i32, i32, i32
  }
  func.func @transform_1(%arg0: i32) -> (i32, i32) {
    %c0_i32 = arith.constant 0 : i32
    %c0_i32_0 = arith.constant 0 : i32
    %c0_i32_1 = arith.constant 0 : i32
    return %c0_i32, %c0_i32_0 : i32, i32
  }
  func.func @transform_2(%arg0: i32) -> (i32, i32, i32) {
    %c0_i32 = arith.constant 0 : i32
    %c0_i32_0 = arith.constant 0 : i32
    %c0_i32_1 = arith.constant 0 : i32
    return %arg0, %c0_i32, %c0_i32_0 : i32, i32, i32
  }
}

</mosaic_0001>

<llo_original>
// kernel: unet_down_forward.1
$region0: #{unet_down_forward.1}
  #allocation0 [shape = 'u32[]', space=smem, size = 0x4, offset = 0x4, fixed_abs, tag = 'smem constant byte address 0x4 - core index']
  #allocation1 [shape = 'u32[144,128]{1,0:T(1,128)}', space=vmem, size = 0x12000, scoped, tag = 'internal scratch']
  %s0 = inlined_call_operand.vmem [shape: f32[2,64,64], index: 0, kind: input, shape index: {}]
  %s1 = inlined_call_operand.vmem [shape: f32[8,64], index: 1, kind: input, shape index: {}]
  %s2 = inlined_call_operand.vmem [shape: f32[2,8,64], index: 2, kind: output, shape index: {}]
  %s3 = sld [smem:[#allocation0]]
  $region41: #{unet_down_forward.1} parent=0
    _
  %s5 = ssub.s32 1, %s3
  %s6 = scalar_select 0, %s5, %s3
  loop: start=0, step=1, limit=4
  $region2: #{unet_down_forward.1} parent=0 // loop_pre_header
    _
  $region3: #{unet_down_forward.1} parent=0 // loop_header
    %s8 = sphi 0, %s12
    %p9 = scmp.ge.s32.totalorder %s8, 4
    %s18 = sphi 0, %s20
    %s21 = sphi 0, %s18
    %s22 = sphi 0, %s21
    %s38 = sphi 0, %s22
    %s42 = sphi 0, %s42
    %s44 = sphi 0, %s42
    %s45 = sphi 0, %s44
    %s59 = sphi 0, %s45
    %s65 = sphi 0, %s67
    %s68 = sphi 0, %s65
    %s69 = sphi 0, %s68
    %s85 = sphi 0, %s69
  $region4: #{unet_down_forward.1} parent=0 // loop_header_branch
    %11 = sbr.rel (%p9) target = $region8
  $region5: #{unet_down_forward.1} parent=0 // loop_body
    %s13 = ssub.s32 %s8, 1
    %s14 = ssub.s32 %s8, 2
    %s15 = sadd.s32 %s8, 1
    %s16 = ssub.s32 %s8, %s15
    %p17 = scmp.eq.s32.totalorder %s16, 0
    %s19 = sadd.s32 %s18, 1
    %s20 = scalar_select %p17, %s18, %s19
    %p23 = pneg %p17
    %p24 = scmp.eq.s32.totalorder %s8, 1
    %p25 = por %p23, %p24
    %p26 = scmp.ne.s32.totalorder %s18, %s21
    %p27 = scmp.eq.s32.totalorder %s8, 0
    %p28 = por %p26, %p27
    %p29 = scmp.ne.s32.totalorder %s18, %s21
    %p30 = scmp.eq.s32.totalorder %s13, 1
    %p31 = por %p29, %p30
    %p32 = scmp.ne.s32.totalorder %s21, %s22
    %p33 = scmp.eq.s32.totalorder %s13, 0
    %p34 = por %p32, %p33
    %p35 = scmp.ne.s32.totalorder %s21, %s22
    %p36 = scmp.eq.s32.totalorder %s14, 1
    %p37 = por %p35, %p36
    %p39 = scmp.ne.s32.totalorder %s22, %s38
    %p40 = scmp.eq.s32.totalorder %s14, 0
    %p41 = por %p39, %p40
    %s43 = sadd.s32 %s42, 1
    %p46 = scmp.eq.s32.totalorder %s8, 1
    %p47 = scmp.ne.s32.totalorder %s42, %s44
    %p48 = scmp.eq.s32.totalorder %s8, 0
    %p49 = por %p47, %p48
    %p50 = scmp.ne.s32.totalorder %s42, %s44
    %p51 = scmp.eq.s32.totalorder %s13, 1
    %p52 = por %p50, %p51
    %p53 = scmp.ne.s32.totalorder %s44, %s45
    %p54 = scmp.eq.s32.totalorder %s13, 0
    %p55 = por %p53, %p54
    %p56 = scmp.ne.s32.totalorder %s44, %s45
    %p57 = scmp.eq.s32.totalorder %s14, 1
    %p58 = por %p56, %p57
    %p60 = scmp.ne.s32.totalorder %s45, %s59
    %p61 = scmp.eq.s32.totalorder %s14, 0
    %p62 = por %p60, %p61
    %s63 = ssub.s32 %s8, %s15
    %p64 = scmp.eq.s32.totalorder %s63, 0
    %s66 = sadd.s32 %s65, 1
    %s67 = scalar_select %p64, %s65, %s66
    %p70 = pneg %p64
    %p71 = scmp.eq.s32.totalorder %s8, 1
    %p72 = por %p70, %p71
    %p73 = scmp.ne.s32.totalorder %s65, %s68
    %p74 = scmp.eq.s32.totalorder %s8, 0
    %p75 = por %p73, %p74
    %p76 = scmp.ne.s32.totalorder %s65, %s68
    %p77 = scmp.eq.s32.totalorder %s13, 1
    %p78 = por %p76, %p77
    %p79 = scmp.ne.s32.totalorder %s68, %s69
    %p80 = scmp.eq.s32.totalorder %s13, 0
    %p81 = por %p79, %p80
    %p82 = scmp.ne.s32.totalorder %s68, %s69
    %p83 = scmp.eq.s32.totalorder %s14, 1
    %p84 = por %p82, %p83
    %p86 = scmp.ne.s32.totalorder %s69, %s85
    %p87 = scmp.eq.s32.totalorder %s14, 0
    %p88 = por %p86, %p87
    %p89 = scmp.le.s32.totalorder 1, %s8
    %p90 = scmp.lt.s32.totalorder %s8, 3
    %p91 = pnand %p89, %p90
    %p92 = pneg %p91
    // Predicated region
    $region9: #{unet_down_forward.1} parent=5 // pred_check
      _
    $region10: #{unet_down_forward.1} parent=5 // pred_check_branch
      %94 = sbr.rel (%p91) target = $region12
    $region11: #{unet_down_forward.1} parent=5 // pred_region
      %s95 = ssub.s32 %s8, 1
      // Predicated region
      $region13: #{unet_down_forward.1} parent=11 // pred_check
        %p96 = pneg %p55
      $region14: #{unet_down_forward.1} parent=11 // pred_check_branch
        %98 = sbr.rel (%p96) target = $region16
      $region15: #{unet_down_forward.1} parent=11 // pred_region
        _
      $region16: #{unet_down_forward.1} parent=11 // pred_fallthru
        _
    $region12: #{unet_down_forward.1} parent=5 // pred_fallthru
      _
    %p99 = scmp.lt.s32.totalorder %s8, 2
    // Predicated region
    $region17: #{unet_down_forward.1} parent=5 // pred_check
      %p100 = pneg %p99
    $region18: #{unet_down_forward.1} parent=5 // pred_check_branch
      %102 = sbr.rel (%p100) target = $region20
    $region19: #{unet_down_forward.1} parent=5 // pred_region
      // Predicated region
      $region21: #{unet_down_forward.1} parent=19 // pred_check
        %p103 = pneg %p28
      $region22: #{unet_down_forward.1} parent=19 // pred_check_branch
        %105 = sbr.rel (%p103) target = $region24
      $region23: #{unet_down_forward.1} parent=19 // pred_region
        %p106 = scmp.lt.s32.totalorder %s8, 1
        %s107 = scalar_select %p106, %s8, 1
        %s108 = smul.addr %s107, 8
        %s109 = smul.addr %s108, 8
        %s110 = scalar_lea.vmem %s0, %s109
      $region24: #{unet_down_forward.1} parent=19 // pred_fallthru
        _
    $region20: #{unet_down_forward.1} parent=5 // pred_fallthru
      _
    %p111 = scmp.le.s32.totalorder 1, %s8
    %p112 = scmp.lt.s32.totalorder %s8, 3
    %p113 = pnand %p111, %p112
    %p114 = pneg %p113
    // Predicated region
    $region25: #{unet_down_forward.1} parent=5 // pred_check
      _
    $region26: #{unet_down_forward.1} parent=5 // pred_check_branch
      %116 = sbr.rel (%p113) target = $region28
    $region27: #{unet_down_forward.1} parent=5 // pred_region
      %s117 = ssub.s32 %s8, 1
      %p118 = scmp.lt.s32.totalorder %s13, 1
      %s119 = scalar_select %p118, %s13, 1
      %s120 = smul.addr %s119, 8
      %s121 = smul.addr %s120, 8
      %s122 = scalar_lea.vmem %s0, %s121
      %p123 = pneg %p34
      %p124 = pneg %p31
      %p125 = pneg %p55
      %p126 = pneg %p52
      %p127 = pneg %p81
      %p128 = pneg %p78
      %p129 = scmp.lt.s32.totalorder %s13, 1
      %s130 = scalar_select %p129, %s13, 1
      %s131 = smul.addr %s130, 8
      %s132 = scalar_lea.vmem %s2, %s131
      %p133 = scmp.lt.s32.totalorder %s13, 1
      %s134 = scalar_select %p133, %s13, 1
      %s135 = smul.addr %s134, 8
      %s136 = smul.addr %s135, 8
      %s137 = scalar_lea.vmem %s0, %s136
      %p138 = scmp.lt.s32.totalorder %s13, 1
      %s139 = scalar_select %p138, %s13, 1
      %s140 = smul.addr %s139, 8
      %s141 = scalar_lea.vmem %s2, %s140
      %v142 = vld [vmem:[%s137] sm:$0xff]
      %v143 = vld [vmem:[%s137 + $0x8] sm:$0xff]
      %v144 = vld [vmem:[%s137 + $0x10] sm:$0xff]
      %v145 = vld [vmem:[%s137 + $0x18] sm:$0xff]
      %v146 = vld [vmem:[%s137 + $0x20] sm:$0xff]
      %v147 = vld [vmem:[%s137 + $0x28] sm:$0xff]
      %v148 = vld [vmem:[%s137 + $0x30] sm:$0xff]
      %v149 = vld [vmem:[%s137 + $0x38] sm:$0xff]
      %v150 = vld [vmem:[%s1] sm:$0xff]
      %vm151 = vcmask 523264
      %v153 = vsel %vm151, %v150, 0
      %155 = vmatprep.subr.mxu0 0.0
      %156 = vmatpush1.msra.mxu0 %v142
      %157 = vmatprep.subr.mxu0 0.0
      %158 = vmatpush1.msra.mxu0 %v143
      %159 = vmatprep.subr.mxu0 0.0
      %160 = vmatpush1.msra.mxu0 %v144
      %161 = vmatprep.subr.mxu0 0.0
      %162 = vmatpush1.msra.mxu0 %v145
      %163 = vmatprep.subr.mxu0 0.0
      %164 = vmatpush1.msra.mxu0 %v146
      %165 = vmatprep.subr.mxu0 0.0
      %166 = vmatpush1.msra.mxu0 %v147
      %167 = vmatprep.subr.mxu0 0.0
      %168 = vmatpush1.msra.mxu0 %v148
      %169 = vmatprep.subr.mxu0 0.0
      %170 = vmatpush1.msra.mxu0 %v149
      %171 = vmatprep.subr.mxu0 0.0
      %172 = vmatpush1.msra.mxu0 0.0
      %173 = vmatprep.subr.mxu0 0.0
      %174 = vmatpush1.msra.mxu0 0.0
      %175 = vmatprep.subr.mxu0 0.0
      %176 = vmatpush1.msra.mxu0 0.0
      %177 = vmatprep.subr.mxu0 0.0
      %178 = vmatpush1.msra.mxu0 0.0
      %179 = vmatprep.subr.mxu0 0.0
      %180 = vmatpush1.msra.mxu0 0.0
      %181 = vmatprep.subr.mxu0 0.0
      %182 = vmatpush1.msra.mxu0 0.0
      %183 = vmatprep.subr.mxu0 0.0
      %184 = vmatpush1.msra.mxu0 0.0
      %185 = vmatprep.subr.mxu0 0.0
      %186 = vmatpush1.msra.mxu0 0.0
      %187 = vmatprep.subr.mxu0 0.0
      %188 = vmatpush1.msra.mxu0 0.0
      %189 = vmatprep.subr.mxu0 0.0
      %190 = vmatpush1.msra.mxu0 0.0
      %191 = vmatprep.subr.mxu0 0.0
      %192 = vmatpush1.msra.mxu0 0.0
      %193 = vmatprep.subr.mxu0 0.0
      %194 = vmatpush1.msra.mxu0 0.0
      %195 = vmatprep.subr.mxu0 0.0
      %196 = vmatpush1.msra.mxu0 0.0
      %197 = vmatprep.subr.mxu0 0.0
      %198 = vmatpush1.msra.mxu0 0.0
      %199 = vmatprep.subr.mxu0 0.0
      %200 = vmatpush1.msra.mxu0 0.0
      %201 = vmatprep.subr.mxu0 0.0
      %202 = vmatpush1.msra.mxu0 0.0
      %203 = vmatprep.subr.mxu0 0.0
      %204 = vmatpush1.msra.mxu0 0.0
      %205 = vmatprep.subr.mxu0 0.0
      %206 = vmatpush1.msra.mxu0 0.0
      %207 = vmatprep.subr.mxu0 0.0
      %208 = vmatpush1.msra.mxu0 0.0
      %209 = vmatprep.subr.mxu0 0.0
      %210 = vmatpush1.msra.mxu0 0.0
      %211 = vmatprep.subr.mxu0 0.0
      %212 = vmatpush1.msra.mxu0 0.0
      %213 = vmatprep.subr.mxu0 0.0
      %214 = vmatpush1.msra.mxu0 0.0
      %215 = vmatprep.subr.mxu0 0.0
      %216 = vmatpush1.msra.mxu0 0.0
      %217 = vmatprep.subr.mxu0 0.0
      %218 = vmatpush1.msra.mxu0 0.0
      %219 = vmatprep.mubr.f32.mxu0 0.0
      %220 = vmatmul.mubr.f32.gmra.mrb[0].mxu0 %v153
      %v221 = vpop.f32.mrb[0].mxu0
      %v222 = vadd.f32 0.0, %v221
      %v223 = vpop.f32.mrb[0].mxu0
      %224 = vdwg.mxu0
      %v225 = vsel %vm151, %v222, 0.0
      %226 = vadd.xlane.f32.xlu0 %v225
      %v227 = vpop.xlane.xlu0 %226
      %v228 = vmul.f32 %v227, 0.015625
      %v229 = vmul.f32 %v222, %v222
      %v230 = vsel %vm151, %v229, 0.0
      %231 = vadd.xlane.f32.xlu0 %v230
      %v232 = vpop.xlane.xlu0 %231
      %v233 = vmul.f32 %v232, 0.015625
      %v234 = vmul.f32 %v228, %v228
      %v235 = vsub.f32 %v233, %v234
      %v236 = vsub.f32 %v222, %v228
      %v237 = vadd.f32 %v235, 1e-05
      %v238 = vrsqrt.pop %v237
      %v239 = vmul.f32 %v236, %v238
      %vm240 = vcmp.ge.f32.partialorder %v239, 0.0
      %v241 = vmul.f32 %v239, 0.2
      %v242 = vsel %vm240, %v239, %v241
      %243 = vst.msk [vmem:[%s141] sm:$0xff] %vm151, %v242
      %p244 = scmp.lt.s32.totalorder %s13, 1
      %s245 = scalar_select %p244, %s13, 1
      %s246 = smul.addr %s245, 8
      %s247 = scalar_lea.vmem %s2, %s246
      // Predicated region
      $region29: #{unet_down_forward.1} parent=27 // pred_check
        %p248 = pneg %p78
      $region30: #{unet_down_forward.1} parent=27 // pred_check_branch
        %250 = sbr.rel (%p248) target = $region32
      $region31: #{unet_down_forward.1} parent=27 // pred_region
        _
      $region32: #{unet_down_forward.1} parent=27 // pred_fallthru
        _
    $region28: #{unet_down_forward.1} parent=5 // pred_fallthru
      _
    %p251 = scmp.le.s32.totalorder 2, %s8
    // Predicated region
    $region33: #{unet_down_forward.1} parent=5 // pred_check
      %p252 = pneg %p251
    $region34: #{unet_down_forward.1} parent=5 // pred_check_branch
      %254 = sbr.rel (%p252) target = $region36
    $region35: #{unet_down_forward.1} parent=5 // pred_region
      %s255 = ssub.s32 %s8, 2
      // Predicated region
      $region37: #{unet_down_forward.1} parent=35 // pred_check
        %p256 = pneg %p84
      $region38: #{unet_down_forward.1} parent=35 // pred_check_branch
        %258 = sbr.rel (%p256) target = $region40
      $region39: #{unet_down_forward.1} parent=35 // pred_region
        %p259 = scmp.lt.s32.totalorder %s14, 1
        %s260 = scalar_select %p259, %s14, 1
        %s261 = smul.addr %s260, 8
        %s262 = scalar_lea.vmem %s2, %s261
      $region40: #{unet_down_forward.1} parent=35 // pred_fallthru
        _
    $region36: #{unet_down_forward.1} parent=5 // pred_fallthru
      _
  $region6: #{unet_down_forward.1} parent=0 // loop_footer
    %s12 = sadd.s32 1, %s8
  $region7: #{unet_down_forward.1} parent=0 // loop_footer_branch
    %7 = sbr.rel target = $region3
  $region8: #{unet_down_forward.1} parent=0 // loop_exit
    _

</llo_original>
